<compile_context>
chip_gen: v5e
topology: v5e:2x2
jax: 0.10.0
libtpu: 0.0.40
codegen_flags: <defaults>
</compile_context>

<pallas_src>
import functools

import jax
import jax.numpy as jnp
from jax.experimental import pallas as pl
from jax.experimental.pallas import tpu as pltpu


def _round_up(x, m):
    return ((x + m - 1) // m) * m


def _class_invariant_kernel(m1_ref, m2_ref, l1_ref, l2_ref, out_ref, *,
                            delta, tm, tn, n1_true, n2_true, need_mask):
    j = pl.program_id(1)

    # Output tile (8,128) is resident across the j (reduction) axis: init at j == 0.
    @pl.when(j == 0)
    def _init():
        out_ref[...] = jnp.zeros_like(out_ref)

    # TODO(synk): if inputs arrive as bf16, feed the raw tiles to the MXU and
    # post-scale by the inverse norms instead of upcasting the full tiles.
    x1 = m1_ref[...].astype(jnp.float32)          # (tm, D)
    x2 = m2_ref[...].astype(jnp.float32)          # (tn, D)

    eps = jnp.float32(1e-8)
    # Per-row inverse L2 norms, clamped like torch.nn.CosineSimilarity.
    inv1 = 1.0 / jnp.maximum(
        jnp.sqrt(jnp.sum(x1 * x1, axis=-1, keepdims=True)), eps)   # (tm, 1)
    inv2 = 1.0 / jnp.maximum(
        jnp.sqrt(jnp.sum(x2 * x2, axis=-1, keepdims=True)), eps)   # (tn, 1)

    # Pre-scaled rows -> cosine similarity straight off the MXU, no RHS transpose.
    cos = jax.lax.dot_general(
        x1 * inv1, x2 * inv2,
        dimension_numbers=(((1,), (1,)), ((), ())),
        preferred_element_type=jnp.float32)                        # (tm, tn)

    # Label equality: (tm, 1) vs lane-dense (1, tn) broadcast, no transpose.
    same = l1_ref[...] == l2_ref[...]                              # (tm, tn)

    hinge = jnp.maximum(jnp.float32(delta) - cos, 0.0)
    contrib = jnp.where(same, hinge, cos)

    if need_mask:
        i = pl.program_id(0)
        rows = jax.lax.broadcasted_iota(jnp.int32, (tm, tn), 0) + i * tm
        cols = jax.lax.broadcasted_iota(jnp.int32, (tm, tn), 1) + j * tn
        valid = (rows < n1_true) & (cols < n2_true)
        contrib = jnp.where(valid, contrib, 0.0)

    tile_sum = jnp.sum(contrib)
    # Accumulate into the [0, 0] element of this row-block's output tile.
    out_ref[pl.ds(0, 1), pl.ds(0, 1)] = out_ref[pl.ds(0, 1), pl.ds(0, 1)] + tile_sum


def class_invariant(mmd1, mmd2, label1, label2, delta=1.0, *,
                    tile_m=256, tile_n=256):
    """Pallas implementation of classInvariant.forward."""
    n1, d = mmd1.shape
    n2, d2 = mmd2.shape
    assert d == d2
    if n1 == 0 or n2 == 0:
        # TODO(synk): torch returns an uninitialized FloatTensor(1) when num == 0;
        # we return 0.0 for the empty case instead.
        return jnp.zeros((), jnp.float32)

    # Tile geometry. If the whole axis fits in one tile use the full extent
    # (always legal); otherwise tiles must be (8, 128)-aligned.
    if n1 <= tile_m:
        tm, n1p = n1, n1
    else:
        assert tile_m % 8 == 0
        tm, n1p = tile_m, _round_up(n1, tile_m)
    if n2 <= tile_n:
        tn, n2p = n2, n2
    else:
        assert tile_n % 128 == 0
        tn, n2p = tile_n, _round_up(n2, tile_n)
    ni, nj = n1p // tm, n2p // tn
    need_mask = (n1p != n1) or (n2p != n2)

    # TODO(synk): D is kept whole inside each tile; add a K grid axis for very large D.
    m1 = mmd1 if n1p == n1 else jnp.pad(mmd1, ((0, n1p - n1), (0, 0)))
    m2 = mmd2 if n2p == n2 else jnp.pad(mmd2, ((0, n2p - n2), (0, 0)))

    l1 = label1.reshape(n1, 1).astype(jnp.int32)
    l2 = label2.reshape(1, n2).astype(jnp.int32)            # lane-dense
    if n1p != n1:
        l1 = jnp.pad(l1, ((0, n1p - n1), (0, 0)), constant_values=-1)
    if n2p != n2:
        l2 = jnp.pad(l2, ((0, 0), (0, n2p - n2)), constant_values=-2)

    kernel = functools.partial(
        _class_invariant_kernel, delta=float(delta), tm=tm, tn=tn,
        n1_true=n1, n2_true=n2, need_mask=need_mask)

    partials = pl.pallas_call(
        kernel,
        out_shape=jax.ShapeDtypeStruct((ni * 8, 128), jnp.float32),
        grid=(ni, nj),
        in_specs=[
            pl.BlockSpec((tm, d), lambda i, j: (i, 0)),
            pl.BlockSpec((tn, d), lambda i, j: (j, 0)),
            pl.BlockSpec((tm, 1), lambda i, j: (i, 0)),
            pl.BlockSpec((1, tn), lambda i, j: (0, j)),
        ],
        out_specs=pl.BlockSpec((8, 128), lambda i, j: (i, 0)),
        compiler_params=pltpu.CompilerParams(
            dimension_semantics=("parallel", "arbitrary")),
    )(m1, m2, l1, l2)

    # Final cross-block reduction + normalization in the wrapper.
    return jnp.sum(partials) / jnp.float32(n1 * n2)


def _reference(mmd1, mmd2, label1, label2, delta=1.0):
    # Pure-JAX reference for a sanity check.
    eps = 1e-8
    n1 = jnp.maximum(jnp.linalg.norm(mmd1, axis=-1, keepdims=True), eps)
    n2 = jnp.maximum(jnp.linalg.norm(mmd2, axis=-1, keepdims=True), eps)
    cos = (mmd1 @ mmd2.T) / (n1 * n2.T)
    same = label1[:, None] == label2[None, :]
    contrib = jnp.where(same, jnp.maximum(delta - cos, 0.0), cos)
    return jnp.sum(contrib) / (mmd1.shape[0] * mmd2.shape[0])


if __name__ == "__main__":
    key = jax.random.PRNGKey(0)
    k1, k2, k3, k4, k5, k6, k7, k8 = jax.random.split(key, 8)

    # Case 1: tiny shapes (single block per axis) — matches the module's usage.
    N1, N2, D = 8, 8, 32
    mmd1 = jax.random.normal(k1, (N1, D), dtype=jnp.float32)
    mmd2 = jax.random.normal(k2, (N2, D), dtype=jnp.float32)
    label1 = jax.random.randint(k3, (N1,), 0, 4, dtype=jnp.int32)
    label2 = jax.random.randint(k4, (N2,), 0, 4, dtype=jnp.int32)

    result = class_invariant(mmd1, mmd2, label1, label2, delta=1.0)
    jax.block_until_ready(result)
    ref = _reference(mmd1, mmd2, label1, label2, delta=1.0)
    assert jnp.allclose(result, ref, atol=1e-5, rtol=1e-5), (result, ref)

    # Case 2: exercises the tiled / padded / masked path (2x2 grid).
    N1b, N2b, Db = 20, 200, 32
    mmd1b = jax.random.normal(k5, (N1b, Db), dtype=jnp.float32)
    mmd2b = jax.random.normal(k6, (N2b, Db), dtype=jnp.float32)
    label1b = jax.random.randint(k7, (N1b,), 0, 4, dtype=jnp.int32)
    label2b = jax.random.randint(k8, (N2b,), 0, 4, dtype=jnp.int32)

    resultb = class_invariant(mmd1b, mmd2b, label1b, label2b, delta=1.0,
                              tile_m=16, tile_n=128)
    jax.block_until_ready(resultb)
    refb = _reference(mmd1b, mmd2b, label1b, label2b, delta=1.0)
    assert jnp.allclose(resultb, refb, atol=1e-5, rtol=1e-5), (resultb, refb)

    print("KERNEL_OK")
</pallas_src>

<mosaic_0001>
module attributes {stable_mosaic.version = 11 : i64} {
  func.func @_class_invariant_kernel(%arg0: i32, %arg1: i32, %arg2: memref<8x32xf32, #tpu.memory_space<vmem>>, %arg3: memref<8x32xf32, #tpu.memory_space<vmem>>, %arg4: memref<8x1xi32, #tpu.memory_space<vmem>>, %arg5: memref<1x8xi32, #tpu.memory_space<vmem>>, %arg6: memref<8x128xf32, #tpu.memory_space<vmem>>) attributes {dimension_semantics = [#tpu.dimension_semantics<parallel>, #tpu.dimension_semantics<arbitrary>], iteration_bounds = array<i64: 1, 1>, scalar_prefetch = 0 : i64, scratch_operands = 0 : i64, tpu.core_type = #tpu.core_type<tc>, window_params = [{transform_indices = @transform_0, window_bounds = array<i64: 8, 32>}, {transform_indices = @transform_1, window_bounds = array<i64: 8, 32>}, {transform_indices = @transform_2, window_bounds = array<i64: 8, 1>}, {transform_indices = @transform_3, window_bounds = array<i64: 1, 8>}, {transform_indices = @transform_4, window_bounds = array<i64: 8, 128>}]} {
    %c0_i32 = arith.constant 0 : i32
    %0 = arith.cmpi eq, %arg1, %c0_i32 : i32
    %1 = arith.extui %0 : i1 to i32
    %c0_i32_0 = arith.constant 0 : i32
    %2 = arith.cmpi ne, %1, %c0_i32_0 : i32
    scf.if %2 {
      %cst_21 = arith.constant 0.000000e+00 : f32
      %44 = vector.broadcast %cst_21 : f32 to vector<8x128xf32>
      %c0_22 = arith.constant 0 : index
      %c0_23 = arith.constant 0 : index
      %45 = vector.load %arg6[%c0_22, %c0_23] : memref<8x128xf32, #tpu.memory_space<vmem>>, vector<8x128xf32>
      tpu.vector_store %arg6[%c0_22, %c0_23], %44 {strides = array<i32>} : memref<8x128xf32, #tpu.memory_space<vmem>>, vector<8x128xf32>,
    } else {
    }
    %c0 = arith.constant 0 : index
    %c0_1 = arith.constant 0 : index
    %3 = vector.load %arg2[%c0, %c0_1] : memref<8x32xf32, #tpu.memory_space<vmem>>, vector<8x32xf32>
    %c0_2 = arith.constant 0 : index
    %c0_3 = arith.constant 0 : index
    %4 = vector.load %arg3[%c0_2, %c0_3] : memref<8x32xf32, #tpu.memory_space<vmem>>, vector<8x32xf32>
    %5 = arith.mulf %3, %3 : vector<8x32xf32>
    %cst = arith.constant dense<0.000000e+00> : vector<8xf32>
    %6 = vector.multi_reduction <add>, %5, %cst [1] : vector<8x32xf32> to vector<8xf32>
    %7 = vector.shape_cast %6 : vector<8xf32> to vector<8x1xf32>
    %8 = math.sqrt %7 : vector<8x1xf32>
    %cst_4 = arith.constant 9.99999993E-9 : f32
    %9 = vector.broadcast %cst_4 : f32 to vector<8x1xf32>
    %10 = arith.maximumf %8, %9 : vector<8x1xf32>
    %cst_5 = arith.constant 1.000000e+00 : f32
    %11 = vector.broadcast %cst_5 : f32 to vector<8x1xf32>
    %12 = arith.divf %11, %10 : vector<8x1xf32>
    %13 = arith.mulf %4, %4 : vector<8x32xf32>
    %cst_6 = arith.constant dense<0.000000e+00> : vector<8xf32>
    %14 = vector.multi_reduction <add>, %13, %cst_6 [1] : vector<8x32xf32> to vector<8xf32>
    %15 = vector.shape_cast %14 : vector<8xf32> to vector<8x1xf32>
    %16 = math.sqrt %15 : vector<8x1xf32>
    %cst_7 = arith.constant 9.99999993E-9 : f32
    %17 = vector.broadcast %cst_7 : f32 to vector<8x1xf32>
    %18 = arith.maximumf %16, %17 : vector<8x1xf32>
    %cst_8 = arith.constant 1.000000e+00 : f32
    %19 = vector.broadcast %cst_8 : f32 to vector<8x1xf32>
    %20 = arith.divf %19, %18 : vector<8x1xf32>
    %21 = vector.broadcast %12 : vector<8x1xf32> to vector<8x32xf32>
    %22 = arith.mulf %3, %21 : vector<8x32xf32>
    %23 = vector.broadcast %20 : vector<8x1xf32> to vector<8x32xf32>
    %24 = arith.mulf %4, %23 : vector<8x32xf32>
    %cst_9 = arith.constant dense<0.000000e+00> : vector<8x8xf32>
    %25 = tpu.matmul %22, %24, %cst_9 {dimension_numbers = #tpu.dot_dimension_numbers<[1], [1], [0], [0], [0, 0, 1, 0], [], []>} : vector<8x32xf32>, vector<8x32xf32>, vector<8x8xf32> -> vector<8x8xf32>
    %c0_10 = arith.constant 0 : index
    %c0_11 = arith.constant 0 : index
    %26 = vector.load %arg4[%c0_10, %c0_11] : memref<8x1xi32, #tpu.memory_space<vmem>>, vector<8x1xi32>
    %c0_12 = arith.constant 0 : index
    %c0_13 = arith.constant 0 : index
    %27 = vector.load %arg5[%c0_12, %c0_13] : memref<1x8xi32, #tpu.memory_space<vmem>>, vector<1x8xi32>
    %28 = vector.broadcast %26 : vector<8x1xi32> to vector<8x8xi32>
    %29 = vector.broadcast %27 : vector<1x8xi32> to vector<8x8xi32>
    %30 = arith.cmpi eq, %28, %29 : vector<8x8xi32>
    %cst_14 = arith.constant 1.000000e+00 : f32
    %31 = vector.broadcast %cst_14 : f32 to vector<8x8xf32>
    %32 = arith.subf %31, %25 : vector<8x8xf32>
    %cst_15 = arith.constant 0.000000e+00 : f32
    %33 = vector.broadcast %cst_15 : f32 to vector<8x8xf32>
    %34 = arith.maximumf %32, %33 : vector<8x8xf32>
    %35 = arith.select %30, %34, %25 : vector<8x8xi1>, vector<8x8xf32>
    %36 = vector.shape_cast %35 : vector<8x8xf32> to vector<1x8x8xf32>
    %cst_16 = arith.constant dense<0.000000e+00> : vector<1xf32>
    %37 = vector.multi_reduction <add>, %36, %cst_16 [1, 2] : vector<1x8x8xf32> to vector<1xf32>
    %38 = vector.shape_cast %37 : vector<1xf32> to vector<1x1x1xf32>
    %39 = vector.extract %38[0, 0, 0] : f32 from vector<1x1x1xf32>
    %c0_17 = arith.constant 0 : index
    %c0_18 = arith.constant 0 : index
    %40 = vector.load %arg6[%c0_17, %c0_18] : memref<8x128xf32, #tpu.memory_space<vmem>>, vector<1x1xf32>
    %41 = vector.broadcast %39 : f32 to vector<1x1xf32>
    %42 = arith.addf %40, %41 : vector<1x1xf32>
    %c0_19 = arith.constant 0 : index
    %c0_20 = arith.constant 0 : index
    %43 = vector.load %arg6[%c0_19, %c0_20] : memref<8x128xf32, #tpu.memory_space<vmem>>, vector<1x1xf32>
    tpu.vector_store %arg6[%c0_19, %c0_20], %42 {strides = array<i32>} : memref<8x128xf32, #tpu.memory_space<vmem>>, vector<1x1xf32>,
    return
  }
  func.func @transform_0(%arg0: i32, %arg1: i32) -> (i32, i32) {
    %c0_i32 = arith.constant 0 : i32
    %c0_i32_0 = arith.constant 0 : i32
    return %arg0, %c0_i32 : i32, i32
  }
  func.func @transform_1(%arg0: i32, %arg1: i32) -> (i32, i32) {
    %c0_i32 = arith.constant 0 : i32
    %c0_i32_0 = arith.constant 0 : i32
    return %arg1, %c0_i32 : i32, i32
  }
  func.func @transform_2(%arg0: i32, %arg1: i32) -> (i32, i32) {
    %c0_i32 = arith.constant 0 : i32
    %c0_i32_0 = arith.constant 0 : i32
    return %arg0, %c0_i32 : i32, i32
  }
  func.func @transform_3(%arg0: i32, %arg1: i32) -> (i32, i32) {
    %c0_i32 = arith.constant 0 : i32
    %c0_i32_0 = arith.constant 0 : i32
    return %c0_i32, %arg1 : i32, i32
  }
  func.func @transform_4(%arg0: i32, %arg1: i32) -> (i32, i32) {
    %c0_i32 = arith.constant 0 : i32
    %c0_i32_0 = arith.constant 0 : i32
    return %arg0, %c0_i32 : i32, i32
  }
}

</mosaic_0001>

<llo_original>
// kernel: tpu_custom_call.1
$region0: #{tpu_custom_call.1}
  #allocation0 [shape = 'u32[]', space=smem, size = 0x4, offset = 0x4, fixed_abs, tag = 'smem constant byte address 0x4 - core index']
  #allocation1 [shape = 'u32[72,128]{1,0:T(1,128)}', space=vmem, size = 0x9000, scoped, tag = 'internal scratch']
  %s0 = inlined_call_operand.vmem [shape: f32[8,32], index: 0, kind: input, shape index: {}]
  %s1 = inlined_call_operand.hbm [shape: f32[8,32], index: 1, kind: input, shape index: {}]
  %s2 = inlined_call_operand.vmem [shape: s32[8,1], index: 2, kind: input, shape index: {}]
  %s3 = inlined_call_operand.vmem [shape: s32[1,8], index: 3, kind: input, shape index: {}]
  %s4 = inlined_call_operand.hbm [shape: f32[8,128], index: 4, kind: output, shape index: {}]
  %s5 = sld [smem:[#allocation0]]
  $region34: #{tpu_custom_call.1} parent=0
    _
  %s7 = ssub.s32 1, %s5
  %s8 = scalar_select 0, %s7, %s5
  $region1: #{tpu_custom_call.1} parent=0
    #allocation2 [shape = 'u8[4096]{0}', space=vmem, size = 0x1000, scoped, tag = 'input window, operand 1, single buffered']
    #allocation3 [shape = 's32[1]{0}', space=sflag, size = 0x4, scoped, tag = 'scoped memory for tpu_custom_call.1']
    #allocation4 [shape = 's32[1]{0}', space=sflag, size = 0x4, scoped, tag = 'scoped memory for tpu_custom_call.1']
    #allocation5 [shape = 'u8[4096]{0}', space=vmem, size = 0x1000, scoped, tag = 'output window, operand 0, single buffered']
    %9 = vsyncpa [#allocation3], 0
    %10 = vsyncpa [#allocation4], 0
    // Predicated region
    $region2: #{tpu_custom_call.1} parent=1 // pred_check
      _
    $region3: #{tpu_custom_call.1} parent=1 // pred_check_branch
      %12 = sbr.rel (0) target = $region5
    $region4: #{tpu_custom_call.1} parent=1 // pred_region
      _
    $region5: #{tpu_custom_call.1} parent=1 // pred_fallthru
      _
    // Predicated region
    $region6: #{tpu_custom_call.1} parent=1 // pred_check
      _
    $region7: #{tpu_custom_call.1} parent=1 // pred_check_branch
      %14 = sbr.rel (0) target = $region9
    $region8: #{tpu_custom_call.1} parent=1 // pred_region
      %16 = vsyncadd [#allocation3], 0
      %s18 = sshll.u32 %s1, 4
      %s19 = int_to_ptr.hbm [resolvable:$true] %s18
      %s20 = sshll.u32 [#allocation2], 4
      %s21 = int_to_ptr.vmem [resolvable:$true] %s20
      %23 = dma.hbm_to_vmem [thread:$0]  %s19, 128, %s21, [#allocation3]
    $region9: #{tpu_custom_call.1} parent=1 // pred_fallthru
      _
    // Predicated region
    $region10: #{tpu_custom_call.1} parent=1 // pred_check
      _
    $region11: #{tpu_custom_call.1} parent=1 // pred_check_branch
      %25 = sbr.rel (0) target = $region13
    $region12: #{tpu_custom_call.1} parent=1 // pred_region
      _
    $region13: #{tpu_custom_call.1} parent=1 // pred_fallthru
      _
    // Predicated region
    $region14: #{tpu_custom_call.1} parent=1 // pred_check
      _
    $region15: #{tpu_custom_call.1} parent=1 // pred_check_branch
      %27 = sbr.rel (0) target = $region17
    $region16: #{tpu_custom_call.1} parent=1 // pred_region
      _
    $region17: #{tpu_custom_call.1} parent=1 // pred_fallthru
      _
    // Predicated region
    $region18: #{tpu_custom_call.1} parent=1 // pred_check
      _
    $region19: #{tpu_custom_call.1} parent=1 // pred_check_branch
      %29 = sbr.rel (0) target = $region21
    $region20: #{tpu_custom_call.1} parent=1 // pred_region
      %31 = dma.done [#allocation3], 128
    $region21: #{tpu_custom_call.1} parent=1 // pred_fallthru
      _
    %p32 = scmp.eq.s32.totalorder 0, 0
    // Predicated region
    $region22: #{tpu_custom_call.1} parent=1 // pred_check
      %p33 = pneg %p32
    $region23: #{tpu_custom_call.1} parent=1 // pred_check_branch
      %35 = sbr.rel (%p33) target = $region25
    $region24: #{tpu_custom_call.1} parent=1 // pred_region
      %36 = vst [vmem:[#allocation5] sm:$0xff] 0.0
    $region25: #{tpu_custom_call.1} parent=1 // pred_fallthru
      _
    %v37 = vld [vmem:[%s0] sm:$0xff]
    %v38 = vld [vmem:[#allocation2] sm:$0xff]
    %v39 = vmul.f32 %v37, %v37
    %vm40 = vcmask 261120
    %v41 = vsel %vm40, %v39, 0.0
    %42 = vadd.xlane.f32.xlu0 %v41
    %v43 = vpop.xlane.xlu0 %42
    %v44 = vrsqrt.pop %v43
    %v45 = vmul.f32 %v44, %v43
    %v46 = vmul.f32 %v45, %v44
    %v47 = vmul.f32 0.5, %v46
    %v48 = vsub.f32 1.5, %v47
    %v49 = vmul.f32 %v44, %v48
    %v50 = vmul.f32 %v43, %v49
    %vm51 = vcmp.eq.f32.partialorder %v43, inf
    %v52 = vsel %vm51, %v43, %v50
    %vm53 = vcmp.eq.f32.partialorder %v43, 0.0
    %v54 = vand.u32 %v43, 2147483648
    %v55 = vsel %vm53, %v54, %v52
    %v56 = vmax.f32 %v55, 1e-08
    %v57 = vrcp.pop %v56
    %v58 = vmul.f32 %v56, %v57
    %v59 = vsub.f32 1.0, %v58
    %v60 = vmul.f32 %v57, %v59
    %v61 = vadd.f32 %v57, %v60
    %vm62 = vweird.f32 %v56
    %vm63 = vweird.f32 %v57
    %vm64 = vmor %vm62, %vm63
    %v65 = vsel %vm64, %v57, %v61
    %v66 = vand.u32 2147483647, %v56
    %vm67 = vcmp.eq.f32.partialorder %v66, 8.507059e+37
    %v68 = vand.u32 %v56, 2147483648
    %v69 = vor.u32 1.1754944e-38, %v68
    %v70 = vsel %vm67, %v69, %v65
    %v71 = vmul.f32 1.0, %v70
    %v72 = vmul.f32 %v38, %v38
    %v73 = vsel %vm40, %v72, 0.0
    %74 = vadd.xlane.f32.xlu0 %v73
    %v75 = vpop.xlane.xlu0 %74
    %v76 = vrsqrt.pop %v75
    %v77 = vmul.f32 %v76, %v75
    %v78 = vmul.f32 %v77, %v76
    %v79 = vmul.f32 0.5, %v78
    %v80 = vsub.f32 1.5, %v79
    %v81 = vmul.f32 %v76, %v80
    %v82 = vmul.f32 %v75, %v81
    %vm83 = vcmp.eq.f32.partialorder %v75, inf
    %v84 = vsel %vm83, %v75, %v82
    %vm85 = vcmp.eq.f32.partialorder %v75, 0.0
    %v86 = vand.u32 %v75, 2147483648
    %v87 = vsel %vm85, %v86, %v84
    %v88 = vmax.f32 %v87, 1e-08
    %v89 = vrcp.pop %v88
    %v90 = vmul.f32 %v88, %v89
    %v91 = vsub.f32 1.0, %v90
    %v92 = vmul.f32 %v89, %v91
    %v93 = vadd.f32 %v89, %v92
    %vm94 = vweird.f32 %v88
    %vm95 = vweird.f32 %v89
    %vm96 = vmor %vm94, %vm95
    %v97 = vsel %vm96, %v89, %v93
    %v98 = vand.u32 2147483647, %v88
    %vm99 = vcmp.eq.f32.partialorder %v98, 8.507059e+37
    %v100 = vand.u32 %v88, 2147483648
    %v101 = vor.u32 1.1754944e-38, %v100
    %v102 = vsel %vm99, %v101, %v97
    %v103 = vmul.f32 1.0, %v102
    %v104 = vmul.f32 %v37, %v71
    %v105 = vmul.f32 %v38, %v103
    %v107 = vsel %vm40, %v104, 0
    %v110 = vsel %vm40, %v105, 0
    %112 = vmatpush.xpose.msra.mxu0 0.0
    %113 = vmatpush.xpose.msra.mxu0 0.0
    %114 = vmatpush.xpose.msra.mxu0 0.0
    %115 = vmatpush.xpose.msra.mxu0 0.0
    %116 = vmatpush.xpose.msra.mxu0 0.0
    %117 = vmatpush.xpose.msra.mxu0 0.0
    %118 = vmatpush.xpose.msra.mxu0 0.0
    %119 = vmatpush.xpose.msra.mxu0 0.0
    %120 = vmatpush.xpose.msra.mxu0 0.0
    %121 = vmatpush.xpose.msra.mxu0 0.0
    %122 = vmatpush.xpose.msra.mxu0 0.0
    %123 = vmatpush.xpose.msra.mxu0 0.0
    %124 = vmatpush.xpose.msra.mxu0 0.0
    %125 = vmatpush.xpose.msra.mxu0 0.0
    %126 = vmatpush.xpose.msra.mxu0 0.0
    %127 = vmatpush.xpose.msra.mxu0 %v110
    %128 = vmatmul.f32.gmra.mxu0 %v107
    %v129 = vpop.f32.mrf.mxu0
    %v130 = vadd.f32 0.0, %v129
    %131 = vdwg.mxu0
    %v132 = vld [vmem:[%s2] sm:$0xff]
    %v133 = vld [vmem:[%s3] sm:$0x1]
    %134 = vset.pattern.permute.xlu0 0
    %135 = vperm.xlu0 %134, %v132
    %v136 = vpop.permute.xlu0 %135
    %v137 = vperm.slane %v133, 0
    %vm138 = vcmp.eq.s32.totalorder %v136, %v137
    %v139 = vsub.f32 1.0, %v130
    %v140 = vmax.f32 %v139, 0.0
    %v141 = vsel %vm138, %v140, %v130
    %vm142 = vcmask 64512
    %v143 = vsel %vm142, %v141, 0.0
    %144 = vadd.xlane.f32.xlu0 %v143
    %v145 = vpop.xlane.xlu0 %144
    %v146 = vrot.slane %v145, 4
    %v147 = vadd.f32 %v145, %v146
    %v148 = vrot.slane %v147, 2
    %v149 = vadd.f32 %v147, %v148
    %v150 = vrot.slane %v149, 1
    %v151 = vadd.f32 %v149, %v150
    %s152 = vtos %v151
    %v153 = vld [vmem:[#allocation5] sm:$0x1]
    %v154 = vstv %s152
    %v155 = vadd.f32 %v153, %v154
    %vm156 = vcmask 0
    %157 = vst.msk [vmem:[#allocation5] sm:$0x1] %vm156, %v155
    // Predicated region
    $region26: #{tpu_custom_call.1} parent=1 // pred_check
      _
    $region27: #{tpu_custom_call.1} parent=1 // pred_check_branch
      %159 = sbr.rel (0) target = $region29
    $region28: #{tpu_custom_call.1} parent=1 // pred_region
      %161 = vsyncadd [#allocation4], 0
      %s163 = sshll.u32 [#allocation5], 4
      %s164 = int_to_ptr.vmem [resolvable:$true] %s163
      %s165 = sshll.u32 %s4, 4
      %s166 = int_to_ptr.hbm [resolvable:$true] %s165
      %168 = dma.vmem_to_hbm [thread:$0]  %s164, 128, %s166, [#allocation4]
    $region29: #{tpu_custom_call.1} parent=1 // pred_fallthru
      _
    // Predicated region
    $region30: #{tpu_custom_call.1} parent=1 // pred_check
      _
    $region31: #{tpu_custom_call.1} parent=1 // pred_check_branch
      %170 = sbr.rel (0) target = $region33
    $region32: #{tpu_custom_call.1} parent=1 // pred_region
      %172 = dma.done [#allocation4], 128
    $region33: #{tpu_custom_call.1} parent=1 // pred_fallthru
      _
    %173 = vsyncpa [#allocation3], 1
    %174 = vsyncpa [#allocation4], 1

</llo_original>
